<compile_context>
chip_gen: v7x
topology: tpu7x:2x2x1
jax: 0.10.0
libtpu: 0.0.40
codegen_flags: <defaults>
</compile_context>

<pallas_src>
import math

import jax
import jax.numpy as jnp
from jax.experimental import pallas as pl
from jax.experimental.pallas import tpu as pltpu

HIDDEN_SIZE = [32, 64]

# Lane-tile granularity for the batch axis: 256 fills the wider v6e/v7x MXU
# output dimension; on v5e (4x128^2) it is simply two native 128-wide passes.
_LANE_TILE = 256
# Single fused call (grid=()) up to this many rows (~8 MB peak VMEM worst case).
_NO_GRID_MAX_ROWS = 12288
# Below this, even a 2-TC chip is latency bound -> keep the single fused call.
_MULTICORE_MIN_ROWS = 1024


def actor_mlp_kernel(xt_ref, w1_ref, b1_ref, w2_ref, b2_ref, w3_ref, b3_ref, ot_ref):
    """Fused transposed forward: tanh(W3 @ relu(W2 @ relu(W1 @ x^T + b1) + b2) + b3).

    Activations are [features, batch] (batch on the lane axis).  Matmul operands
    are bf16 (MXU); accumulation, bias adds, ReLU and tanh are f32 (v5e-safe).
    """
    x = xt_ref[...].astype(jnp.bfloat16)                       # [in, TB]
    h = jnp.dot(w1_ref[...], x, preferred_element_type=jnp.float32) + b1_ref[...]
    h = jnp.maximum(h, 0.0)                                    # [32, TB] f32
    h = jnp.dot(w2_ref[...], h.astype(jnp.bfloat16),
                preferred_element_type=jnp.float32) + b2_ref[...]
    h = jnp.maximum(h, 0.0)                                    # [64, TB] f32
    h = jnp.dot(w3_ref[...], h.astype(jnp.bfloat16),
                preferred_element_type=jnp.float32) + b3_ref[...]
    ot_ref[...] = jnp.tanh(h).astype(ot_ref.dtype)             # [out, TB] lane-dense store


def _round_up(x, m):
    return ((x + m - 1) // m) * m


def _detect_num_tensorcores():
    """Best-effort TensorCores-per-chip (2 on v7x, 1 on v5e/v6e).  Safe fallback: 1."""
    try:
        info = pltpu.get_tpu_info()
        for name in ("num_cores", "num_tensorcores", "tensorcore_count"):
            n = getattr(info, name, None)
            if isinstance(n, int) and 1 <= n <= 8:
                return n
    except Exception:
        pass
    try:
        n = getattr(jax.devices()[0], "num_cores", None)
        if isinstance(n, int) and 1 <= n <= 8:
            return n
    except Exception:
        pass
    return 1


def _cost_estimate(batch, in_size, h0, h1, out_size, weight_bytes):
    """Advisory hint so XLA doesn't serialize this tiny custom call."""
    flops = 2 * batch * (in_size * h0 + h0 * h1 + h1 * out_size)
    bytes_accessed = batch * in_size * 4 + weight_bytes + batch * out_size * 4
    return pl.CostEstimate(flops=flops,
                           transcendentals=batch * out_size,
                           bytes_accessed=bytes_accessed)


def actor_forward_transposed(state_t, params, *, batch_tile=8192, num_cores=None):
    """Forward pass on feature-major activations.

    state_t: [input_size, B] (f32, or bf16 if the pipeline can produce it).
    Returns [output_size, B] f32.
    """
    if num_cores is None:
        num_cores = _detect_num_tensorcores()
    in_size, B = state_t.shape
    h0 = params["w1"].shape[0]
    h1 = params["w2"].shape[0]
    out_size = params["w3"].shape[0]

    weights = (params["w1"], params["b1"],
               params["w2"], params["b2"],
               params["w3"], params["b3"])
    weight_bytes = sum(int(w.size) * w.dtype.itemsize for w in weights)
    cost = _cost_estimate(B, in_size, h0, h1, out_size, weight_bytes)
    out_shape = jax.ShapeDtypeStruct((out_size, B), jnp.float32)

    single_call = (B <= _NO_GRID_MAX_ROWS) and (num_cores <= 1 or B < _MULTICORE_MIN_ROWS)
    if single_call:
        # Latency-bound regime: one fused call, grid=(), zero pipelining overhead.
        resident = pl.BlockSpec(memory_space=pltpu.MemorySpace.VMEM)
        return pl.pallas_call(
            actor_mlp_kernel,
            out_shape=out_shape,
            in_specs=[resident] * 7,
            out_specs=resident,
            cost_estimate=cost,
        )(state_t, *weights)

    # Large batch: tile the batch(-lane) axis only.  Per-step pipeline overhead
    # (~0.35 us) demands big tiles; tiles are multiples of 256 lanes.
    tb = _round_up(max(int(batch_tile), _LANE_TILE), _LANE_TILE)
    if num_cores > 1:
        # Keep >= 2 grid steps per TensorCore so the "parallel" axis actually
        # shards across both cores on v7x (no-op sizing on single-TC v5e/v6e).
        tb = min(tb, _round_up(pl.cdiv(B, 2 * num_cores), _LANE_TILE))
    tb = min(tb, _round_up(B, _LANE_TILE))
    grid = (pl.cdiv(B, tb),)

    x_spec = pl.BlockSpec((in_size, tb), lambda i: (0, i))
    out_spec = pl.BlockSpec((out_size, tb), lambda i: (0, i))
    # Explicit constant-index specs: same block every step -> the pipeline keeps
    # the (tiny) weights VMEM-resident instead of re-DMA'ing them per grid step.
    weight_specs = [pl.BlockSpec(w.shape, lambda i: (0, 0)) for w in weights]

    # NOTE: when B % tb != 0 the last step computes on stale lanes.  This is safe
    # only because every op is per-column independent and Pallas masks the
    # out-of-bounds writeback -- do NOT add cross-batch reductions to the kernel.
    return pl.pallas_call(
        actor_mlp_kernel,
        out_shape=out_shape,
        grid=grid,
        in_specs=[x_spec] + weight_specs,
        out_specs=out_spec,
        cost_estimate=cost,
        compiler_params=pltpu.CompilerParams(
            dimension_semantics=("parallel",)),
    )(state_t, *weights)


def actor_forward(state, params, *, batch_tile=8192, num_cores=None):
    """PyTorch-layout entry point: state [B, input_size] -> action [B, output_size].

    The transposes here are pure layout plumbing (they fuse into a surrounding
    jit); callers that can keep activations feature-major should call
    actor_forward_transposed directly (and may pass bf16 state).
    """
    out_t = actor_forward_transposed(state.T, params,
                                     batch_tile=batch_tile, num_cores=num_cores)
    return out_t.T


def init_actor_params(key, input_size, hidden_size, output_size):
    """nn.Linear-style U(-1/sqrt(fan_in), +1/sqrt(fan_in)) init.

    Native [out, in] weight layout (bf16, MXU operands); biases f32 [out, 1]
    columns (added post-accumulate in f32).
    """
    dims = [input_size, hidden_size[0], hidden_size[1], output_size]
    params = {}
    for i in range(3):
        fan_in, fan_out = dims[i], dims[i + 1]
        bound = 1.0 / math.sqrt(fan_in)
        key, kw, kb = jax.random.split(key, 3)
        w = jax.random.uniform(kw, (fan_out, fan_in), jnp.float32,
                               minval=-bound, maxval=bound)
        b = jax.random.uniform(kb, (fan_out, 1), jnp.float32,
                               minval=-bound, maxval=bound)
        params[f"w{i+1}"] = w.astype(jnp.bfloat16)
        params[f"b{i+1}"] = b
    return params


def actor_forward_ref(state, params):
    """Pure-JAX reference matching the kernel numerics (bf16 MXU operands, f32 acc)."""
    def layer(x, w, b):
        return jnp.dot(x.astype(jnp.bfloat16), w.T,
                       preferred_element_type=jnp.float32) + b.T
    x = jnp.maximum(layer(state, params["w1"], params["b1"]), 0.0)
    x = jnp.maximum(layer(x, params["w2"], params["b2"]), 0.0)
    return jnp.tanh(layer(x, params["w3"], params["b3"]))


def actor_forward_ref_f32(state, params):
    """Exact f32 semantics of the PyTorch module (loose sanity check vs bf16 path)."""
    def layer(x, w, b):
        return x @ w.astype(jnp.float32).T + b.T
    x = jnp.maximum(layer(state, params["w1"], params["b1"]), 0.0)
    x = jnp.maximum(layer(x, params["w2"], params["b2"]), 0.0)
    return jnp.tanh(layer(x, params["w3"], params["b3"]))


if __name__ == "__main__":
    key = jax.random.PRNGKey(0)

    batch = 8
    input_size = 16
    output_size = 4

    key, k_state, k_params = jax.random.split(key, 3)
    state = jax.random.normal(k_state, (batch, input_size), dtype=jnp.float32)
    params = init_actor_params(k_params, input_size, HIDDEN_SIZE, output_size)

    # --- Small-batch (latency-bound) path: single fused call, grid=() ---
    out = jax.block_until_ready(actor_forward(state, params))
    assert out.shape == (batch, output_size)
    assert jnp.allclose(out, actor_forward_ref(state, params), atol=1e-3, rtol=1e-3), \
        "mismatch vs matched (bf16-MXU) JAX reference (small-batch path)"
    assert jnp.allclose(out, actor_forward_ref_f32(state, params), atol=5e-2, rtol=5e-2), \
        "mismatch vs f32 semantics (beyond bf16 tolerance)"

    # --- Odd-sized medium batch: still the single resident call ---
    key, k_mid = jax.random.split(key)
    mid_state = jax.random.normal(k_mid, (1000, input_size), dtype=jnp.float32)
    mid_out = jax.block_until_ready(actor_forward(mid_state, params))
    assert mid_out.shape == (1000, output_size)
    assert jnp.allclose(mid_out, actor_forward_ref(mid_state, params),
                        atol=1e-3, rtol=1e-3), \
        "mismatch vs JAX reference (odd-sized single-call path)"

    # --- Gridded path (num_cores=2 forces the parallel-axis sizing v7x would use);
    #     ragged tail (1300 % 512 != 0) exercises the masked writeback ---
    key, k_big = jax.random.split(key)
    big_b = 1300
    big_state = jax.random.normal(k_big, (big_b, input_size), dtype=jnp.float32)
    big_out = jax.block_until_ready(actor_forward(big_state, params, num_cores=2))
    assert big_out.shape == (big_b, output_size)
    assert jnp.allclose(big_out, actor_forward_ref(big_state, params),
                        atol=1e-3, rtol=1e-3), \
        "mismatch vs JAX reference (tiled/parallel batch path)"

    # TODO(synk): if the surrounding RL pipeline can hand over bf16, feature-major
    # state, call actor_forward_transposed directly and skip the wrapper transposes.

    print("KERNEL_OK")
</pallas_src>

<mosaic_0001>
module attributes {stable_mosaic.version = 11 : i64} {
  func.func @actor_mlp_kernel(%arg0: memref<16x8xf32, #tpu.memory_space<vmem>>, %arg1: memref<32x16xbf16, #tpu.memory_space<vmem>>, %arg2: memref<32x1xf32, #tpu.memory_space<vmem>>, %arg3: memref<64x32xbf16, #tpu.memory_space<vmem>>, %arg4: memref<64x1xf32, #tpu.memory_space<vmem>>, %arg5: memref<4x64xbf16, #tpu.memory_space<vmem>>, %arg6: memref<4x1xf32, #tpu.memory_space<vmem>>, %arg7: memref<4x8xf32, #tpu.memory_space<vmem>>) attributes {dimension_semantics = [], scalar_prefetch = 0 : i64, scratch_operands = 0 : i64, tpu.core_type = #tpu.core_type<tc>} {
    %c0 = arith.constant 0 : index
    %c0_0 = arith.constant 0 : index
    %0 = vector.load %arg0[%c0, %c0_0] : memref<16x8xf32, #tpu.memory_space<vmem>>, vector<16x8xf32>
    %1 = arith.truncf %0 : vector<16x8xf32> to vector<16x8xbf16>
    %c0_1 = arith.constant 0 : index
    %c0_2 = arith.constant 0 : index
    %2 = vector.load %arg1[%c0_1, %c0_2] : memref<32x16xbf16, #tpu.memory_space<vmem>>, vector<32x16xbf16>
    %cst = arith.constant dense<0.000000e+00> : vector<32x8xf32>
    %3 = tpu.matmul %2, %1, %cst {dimension_numbers = #tpu.dot_dimension_numbers<[1], [0], [0], [1], [0, 0, 1, 1], [], []>} : vector<32x16xbf16>, vector<16x8xbf16>, vector<32x8xf32> -> vector<32x8xf32>
    %c0_3 = arith.constant 0 : index
    %c0_4 = arith.constant 0 : index
    %4 = vector.load %arg2[%c0_3, %c0_4] : memref<32x1xf32, #tpu.memory_space<vmem>>, vector<32x1xf32>
    %5 = vector.broadcast %4 : vector<32x1xf32> to vector<32x8xf32>
    %6 = arith.addf %3, %5 : vector<32x8xf32>
    %cst_5 = arith.constant 0.000000e+00 : f32
    %7 = vector.broadcast %cst_5 : f32 to vector<32x8xf32>
    %8 = arith.maximumf %6, %7 : vector<32x8xf32>
    %c0_6 = arith.constant 0 : index
    %c0_7 = arith.constant 0 : index
    %9 = vector.load %arg3[%c0_6, %c0_7] : memref<64x32xbf16, #tpu.memory_space<vmem>>, vector<64x32xbf16>
    %10 = arith.truncf %8 : vector<32x8xf32> to vector<32x8xbf16>
    %cst_8 = arith.constant dense<0.000000e+00> : vector<64x8xf32>
    %11 = tpu.matmul %9, %10, %cst_8 {dimension_numbers = #tpu.dot_dimension_numbers<[1], [0], [0], [1], [0, 0, 1, 1], [], []>} : vector<64x32xbf16>, vector<32x8xbf16>, vector<64x8xf32> -> vector<64x8xf32>
    %c0_9 = arith.constant 0 : index
    %c0_10 = arith.constant 0 : index
    %12 = vector.load %arg4[%c0_9, %c0_10] : memref<64x1xf32, #tpu.memory_space<vmem>>, vector<64x1xf32>
    %13 = vector.broadcast %12 : vector<64x1xf32> to vector<64x8xf32>
    %14 = arith.addf %11, %13 : vector<64x8xf32>
    %cst_11 = arith.constant 0.000000e+00 : f32
    %15 = vector.broadcast %cst_11 : f32 to vector<64x8xf32>
    %16 = arith.maximumf %14, %15 : vector<64x8xf32>
    %c0_12 = arith.constant 0 : index
    %c0_13 = arith.constant 0 : index
    %17 = vector.load %arg5[%c0_12, %c0_13] : memref<4x64xbf16, #tpu.memory_space<vmem>>, vector<4x64xbf16>
    %18 = arith.truncf %16 : vector<64x8xf32> to vector<64x8xbf16>
    %cst_14 = arith.constant dense<0.000000e+00> : vector<4x8xf32>
    %19 = tpu.matmul %17, %18, %cst_14 {dimension_numbers = #tpu.dot_dimension_numbers<[1], [0], [0], [1], [0, 0, 1, 1], [], []>} : vector<4x64xbf16>, vector<64x8xbf16>, vector<4x8xf32> -> vector<4x8xf32>
    %c0_15 = arith.constant 0 : index
    %c0_16 = arith.constant 0 : index
    %20 = vector.load %arg6[%c0_15, %c0_16] : memref<4x1xf32, #tpu.memory_space<vmem>>, vector<4x1xf32>
    %21 = vector.broadcast %20 : vector<4x1xf32> to vector<4x8xf32>
    %22 = arith.addf %19, %21 : vector<4x8xf32>
    %23 = math.tanh %22 : vector<4x8xf32>
    %c0_17 = arith.constant 0 : index
    %c0_18 = arith.constant 0 : index
    %24 = vector.load %arg7[%c0_17, %c0_18] : memref<4x8xf32, #tpu.memory_space<vmem>>, vector<4x8xf32>
    tpu.vector_store %arg7[%c0_17, %c0_18], %23 {strides = array<i32>} : memref<4x8xf32, #tpu.memory_space<vmem>>, vector<4x8xf32>,
    return
  }
}

</mosaic_0001>

<llo_original>
// kernel: tpu_custom_call.1
$region0: #{tpu_custom_call.1}
  #allocation0 [shape = 'u32[]', space=smem, size = 0x4, offset = 0x4, fixed_abs, tag = 'smem constant byte address 0x4 - core index']
  #allocation1 [shape = 'u32[144,128]{1,0:T(1,128)}', space=vmem, size = 0x12000, scoped, tag = 'internal scratch']
  %s0 = inlined_call_operand.vmem [shape: f32[16,8], index: 0, kind: input, shape index: {}]
  %s1 = inlined_call_operand.vmem [shape: bf16[32,16], index: 1, kind: input, shape index: {}]
  %s2 = inlined_call_operand.vmem [shape: f32[32,1], index: 2, kind: input, shape index: {}]
  %s3 = inlined_call_operand.vmem [shape: bf16[64,32], index: 3, kind: input, shape index: {}]
  %s4 = inlined_call_operand.vmem [shape: f32[64,1], index: 4, kind: input, shape index: {}]
  %s5 = inlined_call_operand.vmem [shape: bf16[4,64], index: 5, kind: input, shape index: {}]
  %s6 = inlined_call_operand.vmem [shape: f32[4,1], index: 6, kind: input, shape index: {}]
  %s7 = inlined_call_operand.hbm [shape: f32[4,8], index: 7, kind: output, shape index: {}]
  %s8 = sld [smem:[#allocation0]]
  $region38: #{tpu_custom_call.1} parent=0
    _
  %s10 = ssub.s32 1, %s8
  %s11 = scalar_select 0, %s10, %s8
  $region1: #{tpu_custom_call.1} parent=0
    #allocation2 [shape = 'u8[2048]{0}', space=vmem, size = 0x800, scoped, tag = 'output window, operand 0, single buffered']
    #allocation3 [shape = 's32[1]{0}', space=sflag, size = 0x4, scoped, tag = 'scoped memory for tpu_custom_call.1']
    %12 = vsyncpa [#allocation3], 0
    // Predicated region
    $region2: #{tpu_custom_call.1} parent=1 // pred_check
      _
    $region3: #{tpu_custom_call.1} parent=1 // pred_check_branch
      %14 = sbr.rel (0) target = $region5
    $region4: #{tpu_custom_call.1} parent=1 // pred_region
      _
    $region5: #{tpu_custom_call.1} parent=1 // pred_fallthru
      _
    // Predicated region
    $region6: #{tpu_custom_call.1} parent=1 // pred_check
      _
    $region7: #{tpu_custom_call.1} parent=1 // pred_check_branch
      %16 = sbr.rel (0) target = $region9
    $region8: #{tpu_custom_call.1} parent=1 // pred_region
      _
    $region9: #{tpu_custom_call.1} parent=1 // pred_fallthru
      _
    // Predicated region
    $region10: #{tpu_custom_call.1} parent=1 // pred_check
      _
    $region11: #{tpu_custom_call.1} parent=1 // pred_check_branch
      %18 = sbr.rel (0) target = $region13
    $region12: #{tpu_custom_call.1} parent=1 // pred_region
      _
    $region13: #{tpu_custom_call.1} parent=1 // pred_fallthru
      _
    // Predicated region
    $region14: #{tpu_custom_call.1} parent=1 // pred_check
      _
    $region15: #{tpu_custom_call.1} parent=1 // pred_check_branch
      %20 = sbr.rel (0) target = $region17
    $region16: #{tpu_custom_call.1} parent=1 // pred_region
      _
    $region17: #{tpu_custom_call.1} parent=1 // pred_fallthru
      _
    // Predicated region
    $region18: #{tpu_custom_call.1} parent=1 // pred_check
      _
    $region19: #{tpu_custom_call.1} parent=1 // pred_check_branch
      %22 = sbr.rel (0) target = $region21
    $region20: #{tpu_custom_call.1} parent=1 // pred_region
      _
    $region21: #{tpu_custom_call.1} parent=1 // pred_fallthru
      _
    // Predicated region
    $region22: #{tpu_custom_call.1} parent=1 // pred_check
      _
    $region23: #{tpu_custom_call.1} parent=1 // pred_check_branch
      %24 = sbr.rel (0) target = $region25
    $region24: #{tpu_custom_call.1} parent=1 // pred_region
      _
    $region25: #{tpu_custom_call.1} parent=1 // pred_fallthru
      _
    // Predicated region
    $region26: #{tpu_custom_call.1} parent=1 // pred_check
      _
    $region27: #{tpu_custom_call.1} parent=1 // pred_check_branch
      %26 = sbr.rel (0) target = $region29
    $region28: #{tpu_custom_call.1} parent=1 // pred_region
      _
    $region29: #{tpu_custom_call.1} parent=1 // pred_fallthru
      _
    %v28 = vld [vmem:[%s0] sm:$0xff]
    %v29 = vld [vmem:[%s0 + $0x8] sm:$0xff]
    %v30 = vpack.c.bf16 %v29, %v28
    %v31 = vld [vmem:[%s1] sm:$0xf]
    %v32 = vld [vmem:[%s1 + $0x4] sm:$0xf]
    %v33 = vld [vmem:[%s1 + $0x8] sm:$0xf]
    %v34 = vld [vmem:[%s1 + $0xc] sm:$0xf]
    %v35 = vld [vmem:[%s2] sm:$0xff]
    %v36 = vld [vmem:[%s2 + $0x8] sm:$0xff]
    %v37 = vld [vmem:[%s2 + $0x10] sm:$0xff]
    %v38 = vld [vmem:[%s2 + $0x18] sm:$0xff]
    %40 = vset.pattern.permute.xlu0 0
    %41 = vperm.xlu0 %40, %v35
    %v42 = vpop.permute.xlu0 %41
    %45 = vset.pattern.permute.xlu0 0
    %46 = vperm.xlu0 %45, %v36
    %v47 = vpop.permute.xlu0 %46
    %50 = vset.pattern.permute.xlu0 0
    %51 = vperm.xlu0 %50, %v37
    %v52 = vpop.permute.xlu0 %51
    %55 = vset.pattern.permute.xlu0 0
    %56 = vperm.xlu0 %55, %v38
    %v57 = vpop.permute.xlu0 %56
    %v63 = vunpack.c.l.b16 %v31
    %v64 = vunpack.c.l.b16 %v32
    %v65 = vunpack.c.l.b16 %v33
    %v66 = vunpack.c.l.b16 %v34
    %v67 = vpack.c.b16 %v64, %v63
    %v68 = vpack.c.b16 %v66, %v65
    %vm69 = vcmask 130048
    %v71 = vsel %vm69, %v67, 0
    %v74 = vsel %vm69, %v68, 0
    %76 = vmatprep.subr.bf16.mxu0 0
    %77 = vmatpush1.bf16.msra.mxu0 %v30
    %78 = vmatprep.subr.bf16.mxu0 0
    %79 = vmatpush1.bf16.msra.mxu0 0
    %80 = vmatprep.subr.bf16.mxu0 0
    %81 = vmatpush1.bf16.msra.mxu0 0
    %82 = vmatprep.subr.bf16.mxu0 0
    %83 = vmatpush1.bf16.msra.mxu0 0
    %84 = vmatprep.subr.bf16.mxu0 0
    %85 = vmatpush1.bf16.msra.mxu0 0
    %86 = vmatprep.subr.bf16.mxu0 0
    %87 = vmatpush1.bf16.msra.mxu0 0
    %88 = vmatprep.subr.bf16.mxu0 0
    %89 = vmatpush1.bf16.msra.mxu0 0
    %90 = vmatprep.subr.bf16.mxu0 0
    %91 = vmatpush1.bf16.msra.mxu0 0
    %92 = vmatprep.subr.bf16.mxu0 0
    %93 = vmatpush1.bf16.msra.mxu0 0
    %94 = vmatprep.subr.bf16.mxu0 0
    %95 = vmatpush1.bf16.msra.mxu0 0
    %96 = vmatprep.subr.bf16.mxu0 0
    %97 = vmatpush1.bf16.msra.mxu0 0
    %98 = vmatprep.subr.bf16.mxu0 0
    %99 = vmatpush1.bf16.msra.mxu0 0
    %100 = vmatprep.subr.bf16.mxu0 0
    %101 = vmatpush1.bf16.msra.mxu0 0
    %102 = vmatprep.subr.bf16.mxu0 0
    %103 = vmatpush1.bf16.msra.mxu0 0
    %104 = vmatprep.subr.bf16.mxu0 0
    %105 = vmatpush1.bf16.msra.mxu0 0
    %106 = vmatprep.subr.bf16.mxu0 0
    %107 = vmatpush1.bf16.msra.mxu0 0
    %108 = vmatprep.mubr.bf16.mxu0 0
    %109 = vmatmul.mubr.bf16.gmra.mrb[0].mxu0 %v71
    %v110 = vpop.f32.mrb[0].mxu0
    %v111 = vadd.f32 %v42, %v110
    %v112 = vpop.f32.mrb[0].mxu0
    %v113 = vpop.f32.mrb[0].mxu0
    %v114 = vadd.f32 %v47, %v113
    %v115 = vpop.f32.mrb[0].mxu0
    %116 = vmatprep.mubr.bf16.mxu0 0
    %117 = vmatmul.mubr.bf16.gmra.mrb[0].mxu0 %v74
    %v118 = vpop.f32.mrb[0].mxu0
    %v119 = vadd.f32 %v52, %v118
    %v120 = vpop.f32.mrb[0].mxu0
    %v121 = vpop.f32.mrb[0].mxu0
    %v122 = vadd.f32 %v57, %v121
    %v123 = vpop.f32.mrb[0].mxu0
    %124 = vdwg.mxu0
    %v125 = vmax.f32 %v111, 0.0
    %v126 = vmax.f32 %v114, 0.0
    %v127 = vmax.f32 %v119, 0.0
    %v128 = vmax.f32 %v122, 0.0
    %v129 = vld [vmem:[%s3] sm:$0xf]
    %v130 = vld [vmem:[%s3 + $0x4] sm:$0xf]
    %v131 = vld [vmem:[%s3 + $0x8] sm:$0xf]
    %v132 = vld [vmem:[%s3 + $0xc] sm:$0xf]
    %v133 = vld [vmem:[%s3 + $0x10] sm:$0xf]
    %v134 = vld [vmem:[%s3 + $0x14] sm:$0xf]
    %v135 = vld [vmem:[%s3 + $0x18] sm:$0xf]
    %v136 = vld [vmem:[%s3 + $0x1c] sm:$0xf]
    %v137 = vpack.c.bf16 %v126, %v125
    %v138 = vpack.c.bf16 %v128, %v127
    %v139 = vld [vmem:[%s4] sm:$0xff]
    %v140 = vld [vmem:[%s4 + $0x8] sm:$0xff]
    %v141 = vld [vmem:[%s4 + $0x10] sm:$0xff]
    %v142 = vld [vmem:[%s4 + $0x18] sm:$0xff]
    %v143 = vld [vmem:[%s4 + $0x20] sm:$0xff]
    %v144 = vld [vmem:[%s4 + $0x28] sm:$0xff]
    %v145 = vld [vmem:[%s4 + $0x30] sm:$0xff]
    %v146 = vld [vmem:[%s4 + $0x38] sm:$0xff]
    %148 = vset.pattern.permute.xlu0 0
    %149 = vperm.xlu0 %148, %v139
    %v150 = vpop.permute.xlu0 %149
    %153 = vset.pattern.permute.xlu0 0
    %154 = vperm.xlu0 %153, %v140
    %v155 = vpop.permute.xlu0 %154
    %158 = vset.pattern.permute.xlu0 0
    %159 = vperm.xlu0 %158, %v141
    %v160 = vpop.permute.xlu0 %159
    %163 = vset.pattern.permute.xlu0 0
    %164 = vperm.xlu0 %163, %v142
    %v165 = vpop.permute.xlu0 %164
    %168 = vset.pattern.permute.xlu0 0
    %169 = vperm.xlu0 %168, %v143
    %v170 = vpop.permute.xlu0 %169
    %173 = vset.pattern.permute.xlu0 0
    %174 = vperm.xlu0 %173, %v144
    %v175 = vpop.permute.xlu0 %174
    %178 = vset.pattern.permute.xlu0 0
    %179 = vperm.xlu0 %178, %v145
    %v180 = vpop.permute.xlu0 %179
    %183 = vset.pattern.permute.xlu0 0
    %184 = vperm.xlu0 %183, %v146
    %v185 = vpop.permute.xlu0 %184
    %v195 = vunpack.c.l.b16 %v129
    %v196 = vunpack.c.l.b16 %v130
    %v197 = vunpack.c.l.b16 %v131
    %v198 = vunpack.c.l.b16 %v132
    %v199 = vunpack.c.l.b16 %v133
    %v200 = vunpack.c.l.b16 %v134
    %v201 = vunpack.c.l.b16 %v135
    %v202 = vunpack.c.l.b16 %v136
    %v203 = vpack.c.b16 %v196, %v195
    %v204 = vpack.c.b16 %v198, %v197
    %v205 = vpack.c.b16 %v200, %v199
    %v206 = vpack.c.b16 %v202, %v201
    %vm207 = vcmask 261120
    %v209 = vsel %vm207, %v203, 0
    %v212 = vsel %vm207, %v204, 0
    %v215 = vsel %vm207, %v205, 0
    %v218 = vsel %vm207, %v206, 0
    %220 = vmatprep.subr.bf16.mxu0 0
    %221 = vmatpush1.bf16.msra.mxu0 %v137
    %222 = vmatprep.subr.bf16.mxu0 0
    %223 = vmatpush1.bf16.msra.mxu0 %v138
    %224 = vmatprep.subr.bf16.mxu0 0
    %225 = vmatpush1.bf16.msra.mxu0 0
    %226 = vmatprep.subr.bf16.mxu0 0
    %227 = vmatpush1.bf16.msra.mxu0 0
    %228 = vmatprep.subr.bf16.mxu0 0
    %229 = vmatpush1.bf16.msra.mxu0 0
    %230 = vmatprep.subr.bf16.mxu0 0
    %231 = vmatpush1.bf16.msra.mxu0 0
    %232 = vmatprep.subr.bf16.mxu0 0
    %233 = vmatpush1.bf16.msra.mxu0 0
    %234 = vmatprep.subr.bf16.mxu0 0
    %235 = vmatpush1.bf16.msra.mxu0 0
    %236 = vmatprep.subr.bf16.mxu0 0
    %237 = vmatpush1.bf16.msra.mxu0 0
    %238 = vmatprep.subr.bf16.mxu0 0
    %239 = vmatpush1.bf16.msra.mxu0 0
    %240 = vmatprep.subr.bf16.mxu0 0
    %241 = vmatpush1.bf16.msra.mxu0 0
    %242 = vmatprep.subr.bf16.mxu0 0
    %243 = vmatpush1.bf16.msra.mxu0 0
    %244 = vmatprep.subr.bf16.mxu0 0
    %245 = vmatpush1.bf16.msra.mxu0 0
    %246 = vmatprep.subr.bf16.mxu0 0
    %247 = vmatpush1.bf16.msra.mxu0 0
    %248 = vmatprep.subr.bf16.mxu0 0
    %249 = vmatpush1.bf16.msra.mxu0 0
    %250 = vmatprep.subr.bf16.mxu0 0
    %251 = vmatpush1.bf16.msra.mxu0 0
    %252 = vmatprep.mubr.bf16.mxu0 0
    %253 = vmatmul.mubr.bf16.gmra.mrb[0].mxu0 %v209
    %v254 = vpop.f32.mrb[0].mxu0
    %v255 = vadd.f32 %v150, %v254
    %v256 = vpop.f32.mrb[0].mxu0
    %v257 = vpop.f32.mrb[0].mxu0
    %v258 = vadd.f32 %v155, %v257
    %v259 = vpop.f32.mrb[0].mxu0
    %260 = vmatprep.mubr.bf16.mxu0 0
    %261 = vmatmul.mubr.bf16.gmra.mrb[0].mxu0 %v212
    %v262 = vpop.f32.mrb[0].mxu0
    %v263 = vadd.f32 %v160, %v262
    %v264 = vpop.f32.mrb[0].mxu0
    %v265 = vpop.f32.mrb[0].mxu0
    %v266 = vadd.f32 %v165, %v265
    %v267 = vpop.f32.mrb[0].mxu0
    %268 = vmatprep.mubr.bf16.mxu0 0
    %269 = vmatmul.mubr.bf16.gmra.mrb[0].mxu0 %v215
    %v270 = vpop.f32.mrb[0].mxu0
    %v271 = vadd.f32 %v170, %v270
    %v272 = vpop.f32.mrb[0].mxu0
    %v273 = vpop.f32.mrb[0].mxu0
    %v274 = vadd.f32 %v175, %v273
    %v275 = vpop.f32.mrb[0].mxu0
    %276 = vmatprep.mubr.bf16.mxu0 0
    %277 = vmatmul.mubr.bf16.gmra.mrb[0].mxu0 %v218
    %v278 = vpop.f32.mrb[0].mxu0
    %v279 = vadd.f32 %v180, %v278
    %v280 = vpop.f32.mrb[0].mxu0
    %v281 = vpop.f32.mrb[0].mxu0
    %v282 = vadd.f32 %v185, %v281
    %v283 = vpop.f32.mrb[0].mxu0
    %284 = vdwg.mxu0
    %v285 = vmax.f32 %v255, 0.0
    %v286 = vmax.f32 %v258, 0.0
    %v287 = vmax.f32 %v263, 0.0
    %v288 = vmax.f32 %v266, 0.0
    %v289 = vmax.f32 %v271, 0.0
    %v290 = vmax.f32 %v274, 0.0
    %v291 = vmax.f32 %v279, 0.0
    %v292 = vmax.f32 %v282, 0.0
    %v293 = vld [vmem:[%s5] sm:$0x3]
    %v294 = vpack.c.bf16 %v286, %v285
    %v295 = vpack.c.bf16 %v288, %v287
    %v296 = vpack.c.bf16 %v290, %v289
    %v297 = vpack.c.bf16 %v292, %v291
    %v298 = vld [vmem:[%s6] sm:$0xf]
    %300 = vset.pattern.permute.xlu0 0
    %301 = vperm.xlu0 %300, %v298
    %v302 = vpop.permute.xlu0 %301
    %vm304 = vcmask 523264
    %v306 = vsel %vm304, %v293, 0
    %308 = vmatprep.subr.bf16.mxu0 0
    %309 = vmatpush1.bf16.msra.mxu0 %v294
    %310 = vmatprep.subr.bf16.mxu0 0
    %311 = vmatpush1.bf16.msra.mxu0 %v295
    %312 = vmatprep.subr.bf16.mxu0 0
    %313 = vmatpush1.bf16.msra.mxu0 %v296
    %314 = vmatprep.subr.bf16.mxu0 0
    %315 = vmatpush1.bf16.msra.mxu0 %v297
    %316 = vmatprep.subr.bf16.mxu0 0
    %317 = vmatpush1.bf16.msra.mxu0 0
    %318 = vmatprep.subr.bf16.mxu0 0
    %319 = vmatpush1.bf16.msra.mxu0 0
    %320 = vmatprep.subr.bf16.mxu0 0
    %321 = vmatpush1.bf16.msra.mxu0 0
    %322 = vmatprep.subr.bf16.mxu0 0
    %323 = vmatpush1.bf16.msra.mxu0 0
    %324 = vmatprep.subr.bf16.mxu0 0
    %325 = vmatpush1.bf16.msra.mxu0 0
    %326 = vmatprep.subr.bf16.mxu0 0
    %327 = vmatpush1.bf16.msra.mxu0 0
    %328 = vmatprep.subr.bf16.mxu0 0
    %329 = vmatpush1.bf16.msra.mxu0 0
    %330 = vmatprep.subr.bf16.mxu0 0
    %331 = vmatpush1.bf16.msra.mxu0 0
    %332 = vmatprep.subr.bf16.mxu0 0
    %333 = vmatpush1.bf16.msra.mxu0 0
    %334 = vmatprep.subr.bf16.mxu0 0
    %335 = vmatpush1.bf16.msra.mxu0 0
    %336 = vmatprep.subr.bf16.mxu0 0
    %337 = vmatpush1.bf16.msra.mxu0 0
    %338 = vmatprep.subr.bf16.mxu0 0
    %339 = vmatpush1.bf16.msra.mxu0 0
    %340 = vmatprep.mubr.bf16.mxu0 0
    %341 = vmatmul.mubr.bf16.gmra.mrb[0].mxu0 %v306
    %v342 = vpop.f32.mrb[0].mxu0
    %v343 = vadd.f32 %v302, %v342
    %v344 = vpop.f32.mrb[0].mxu0
    %v345 = vpop.f32.mrb[0].mxu0
    %v346 = vpop.f32.mrb[0].mxu0
    %347 = vdwg.mxu0
    %v348 = vtanh.pop %v343
    %vm349 = vcmask 60416
    %350 = vst.msk [vmem:[#allocation2] sm:$0xf] %vm349, %v348
    // Predicated region
    $region30: #{tpu_custom_call.1} parent=1 // pred_check
      _
    $region31: #{tpu_custom_call.1} parent=1 // pred_check_branch
      %352 = sbr.rel (0) target = $region33
    $region32: #{tpu_custom_call.1} parent=1 // pred_region
      %s354 = ssub.s32 64, 64
      %355 = vsyncadd [#allocation3], %s354
      %s357 = sshll.u32 [#allocation2], 4
      %s358 = int_to_ptr.vmem [resolvable:$true] %s357
      %360 = dma.vmem_to_hbm [thread:$0]  %s358, 64, %s7, [#allocation3]
    $region33: #{tpu_custom_call.1} parent=1 // pred_fallthru
      _
    // Predicated region
    $region34: #{tpu_custom_call.1} parent=1 // pred_check
      _
    $region35: #{tpu_custom_call.1} parent=1 // pred_check_branch
      %362 = sbr.rel (0) target = $region37
    $region36: #{tpu_custom_call.1} parent=1 // pred_region
      %363 = dma.done [#allocation3], 64
    $region37: #{tpu_custom_call.1} parent=1 // pred_fallthru
      _
    %364 = vsyncpa [#allocation3], 1

</llo_original>
